<compile_context>
chip_gen: v5e
topology: v5e:2x2
jax: 0.10.0
libtpu: 0.0.40
codegen_flags: <defaults>
</compile_context>

<pallas_src>
import functools

import jax
import jax.numpy as jnp
from jax.experimental import pallas as pl
from jax.experimental.pallas import tpu as pltpu


def _round_up(x, m):
    return ((x + m - 1) // m) * m


def actor_critic_fused_kernel(
    x_ref, w1_ref, b1_ref, w2_ref, b2_ref, w3_ref, b3_ref, out_ref,
    *, n_actions,
):
    x = x_ref[...]

    # Layer 1 (actor | critic concatenated along lanes): (TB, in) @ (in, 2H)
    h = jnp.dot(x, w1_ref[...], preferred_element_type=jnp.float32) + b1_ref[...]
    h = jnp.maximum(h, 0.0)

    # Layer 2 (block-diagonal weight keeps actor/critic paths independent)
    h = jnp.dot(h, w2_ref[...], preferred_element_type=jnp.float32) + b2_ref[...]
    h = jnp.maximum(h, 0.0)

    # Layer 3 + value head fused: lanes [0, n_actions) = actor logits,
    # lane n_actions = critic value, remaining lanes = padding (zero weights).
    y = jnp.dot(h, w3_ref[...], preferred_element_type=jnp.float32) + b3_ref[...]

    col = jax.lax.broadcasted_iota(jnp.int32, y.shape, 1)
    is_logit = col < n_actions

    # Numerically-stable softmax over the logit lanes only.
    logits = jnp.where(is_logit, y, -jnp.inf)
    m = jnp.max(logits, axis=-1, keepdims=True)
    e = jnp.where(is_logit, jnp.exp(logits - m), 0.0)
    denom = jnp.sum(e, axis=-1, keepdims=True)
    # Exact reciprocal keeps the 1e-5 reference check; approx=True (EUP vrcp)
    # is a free micro-win if tolerances are relaxed.
    probs = e * pl.reciprocal(denom, approx=False)

    # Lane-dense store: probs in lanes [0, n_actions), raw value in lane
    # n_actions, zeros elsewhere (probs are 0 on non-logit lanes).
    out_ref[...] = jnp.where(col == n_actions, y, probs)


def fuse_params(params):
    """Host-side packing of the 12 per-layer arrays into 6 fused arrays."""
    H = params["aw1"].shape[1]
    n_actions = params["aw3"].shape[1]
    out_width = _round_up(n_actions + 1, 128)

    w1 = jnp.concatenate([params["aw1"], params["cw1"]], axis=1)          # (in, 2H)
    b1 = jnp.concatenate([params["ab1"], params["cb1"]], axis=1)          # (1, 2H)

    w2 = jnp.zeros((2 * H, 2 * H), jnp.float32)
    w2 = w2.at[:H, :H].set(params["aw2"]).at[H:, H:].set(params["cw2"])   # blockdiag
    b2 = jnp.concatenate([params["ab2"], params["cb2"]], axis=1)          # (1, 2H)

    w3 = jnp.zeros((2 * H, out_width), jnp.float32)
    w3 = w3.at[:H, :n_actions].set(params["aw3"])
    w3 = w3.at[H:, n_actions:n_actions + 1].set(params["cw3"])            # (2H, 128)
    b3 = jnp.zeros((1, out_width), jnp.float32)
    b3 = b3.at[:, :n_actions].set(params["ab3"])
    b3 = b3.at[:, n_actions:n_actions + 1].set(params["cb3"])             # (1, 128)

    return w1, b1, w2, b2, w3, b3, n_actions, out_width


def actor_critic_forward(x, params, *, tile_b=128):
    """x: (B, input_dim) float32. Returns (action_probs (B,n_actions), value (B,1))."""
    B, input_dim = x.shape
    w1, b1, w2, b2, w3, b3, n_actions, out_width = fuse_params(params)
    two_h = w1.shape[1]

    # Batch tiling: pad B to a multiple of the tile (tile itself 8-aligned).
    tile_b = min(tile_b, _round_up(B, 8))
    b_padded = _round_up(B, tile_b)
    if b_padded != B:
        x = jnp.pad(x, ((0, b_padded - B), (0, 0)))
    grid = (b_padded // tile_b,)

    const = lambda i: (0, 0)  # weights/biases stay resident across grid steps

    kernel = functools.partial(actor_critic_fused_kernel, n_actions=n_actions)

    out = pl.pallas_call(
        kernel,
        out_shape=jax.ShapeDtypeStruct((b_padded, out_width), jnp.float32),
        grid_spec=pltpu.PrefetchScalarGridSpec(
            num_scalar_prefetch=0,
            grid=grid,
            in_specs=[
                pl.BlockSpec((tile_b, input_dim), lambda i: (i, 0)),  # x tile
                pl.BlockSpec((input_dim, two_h), const),              # W1
                pl.BlockSpec((1, two_h), const),                      # b1
                pl.BlockSpec((two_h, two_h), const),                  # W2 (blockdiag)
                pl.BlockSpec((1, two_h), const),                      # b2
                pl.BlockSpec((two_h, out_width), const),              # W3 (fused head)
                pl.BlockSpec((1, out_width), const),                  # b3
            ],
            out_specs=pl.BlockSpec((tile_b, out_width), lambda i: (i, 0)),
        ),
        compiler_params=pltpu.CompilerParams(
            dimension_semantics=("parallel",),  # shard batch tiles across TCs (v7x)
        ),
    )(x, w1, b1, w2, b2, w3, b3)

    probs = out[:B, :n_actions]
    value = out[:B, n_actions:n_actions + 1]
    return probs, value


def init_params(key, input_dim, n_actions, hidden_dim=128):
    """Deterministic synthetic init (uniform, PyTorch-Linear-like scale)."""
    keys = jax.random.split(key, 12)

    def lin(kw, kb, fan_in, fan_out):
        bound = 1.0 / jnp.sqrt(jnp.float32(fan_in))
        w = jax.random.uniform(kw, (fan_in, fan_out), jnp.float32, -bound, bound)
        b = jax.random.uniform(kb, (1, fan_out), jnp.float32, -bound, bound)
        return w, b

    aw1, ab1 = lin(keys[0], keys[1], input_dim, hidden_dim)
    aw2, ab2 = lin(keys[2], keys[3], hidden_dim, hidden_dim)
    aw3, ab3 = lin(keys[4], keys[5], hidden_dim, n_actions)
    cw1, cb1 = lin(keys[6], keys[7], input_dim, hidden_dim)
    cw2, cb2 = lin(keys[8], keys[9], hidden_dim, hidden_dim)
    cw3, cb3 = lin(keys[10], keys[11], hidden_dim, 1)
    return dict(
        aw1=aw1, ab1=ab1, aw2=aw2, ab2=ab2, aw3=aw3, ab3=ab3,
        cw1=cw1, cb1=cb1, cw2=cw2, cb2=cb2, cw3=cw3, cb3=cb3,
    )


def reference_forward(x, p):
    """Pure-JAX reference (mirrors the PyTorch forward)."""
    h = jnp.maximum(x @ p["aw1"] + p["ab1"], 0.0)
    h = jnp.maximum(h @ p["aw2"] + p["ab2"], 0.0)
    logits = h @ p["aw3"] + p["ab3"]
    probs = jax.nn.softmax(logits, axis=-1)
    c = jnp.maximum(x @ p["cw1"] + p["cb1"], 0.0)
    c = jnp.maximum(c @ p["cw2"] + p["cb2"], 0.0)
    value = c @ p["cw3"] + p["cb3"]
    return probs, value


if __name__ == "__main__":
    # TODO(synk): bf16 weights/activations (~3x MXU on v6e/v7x) intentionally
    # skipped to hold the fp32 1e-5 reference tolerance.
    B, INPUT_DIM, N_ACTIONS, HIDDEN = 16, 32, 4, 128

    key = jax.random.PRNGKey(0)
    k_x, k_p = jax.random.split(key)
    x = jax.random.normal(k_x, (B, INPUT_DIM), dtype=jnp.float32)
    params = init_params(k_p, INPUT_DIM, N_ACTIONS, HIDDEN)

    # tile_b=8 so the demo exercises a multi-step batch grid (grid=(2,)).
    probs, value = actor_critic_forward(x, params, tile_b=8)
    jax.block_until_ready((probs, value))

    # correctness check against pure-JAX reference
    probs_ref, value_ref = reference_forward(x, params)
    assert probs.shape == (B, N_ACTIONS) and value.shape == (B, 1)
    assert jnp.allclose(probs, probs_ref, atol=1e-5, rtol=1e-5)
    assert jnp.allclose(value, value_ref, atol=1e-5, rtol=1e-5)
    assert jnp.allclose(jnp.sum(probs, axis=-1), 1.0, atol=1e-5)

    print("KERNEL_OK")
</pallas_src>

<mosaic_0001>
module attributes {stable_mosaic.version = 11 : i64} {
  func.func @actor_critic_fused_kernel(%arg0: i32, %arg1: memref<8x32xf32, #tpu.memory_space<vmem>>, %arg2: memref<32x256xf32, #tpu.memory_space<vmem>>, %arg3: memref<1x256xf32, #tpu.memory_space<vmem>>, %arg4: memref<256x256xf32, #tpu.memory_space<vmem>>, %arg5: memref<1x256xf32, #tpu.memory_space<vmem>>, %arg6: memref<256x128xf32, #tpu.memory_space<vmem>>, %arg7: memref<1x128xf32, #tpu.memory_space<vmem>>, %arg8: memref<8x128xf32, #tpu.memory_space<vmem>>) attributes {dimension_semantics = [#tpu.dimension_semantics<parallel>], iteration_bounds = array<i64: 2>, scalar_prefetch = 0 : i64, scratch_operands = 0 : i64, tpu.core_type = #tpu.core_type<tc>, window_params = [{transform_indices = @transform_0, window_bounds = array<i64: 8, 32>}, {pipeline_mode = #tpu.pipeline_mode<synchronous>, transform_indices = @transform_1, window_bounds = array<i64: 32, 256>}, {pipeline_mode = #tpu.pipeline_mode<synchronous>, transform_indices = @transform_2, window_bounds = array<i64: 1, 256>}, {pipeline_mode = #tpu.pipeline_mode<synchronous>, transform_indices = @transform_3, window_bounds = array<i64: 256, 256>}, {pipeline_mode = #tpu.pipeline_mode<synchronous>, transform_indices = @transform_4, window_bounds = array<i64: 1, 256>}, {pipeline_mode = #tpu.pipeline_mode<synchronous>, transform_indices = @transform_5, window_bounds = array<i64: 256, 128>}, {pipeline_mode = #tpu.pipeline_mode<synchronous>, transform_indices = @transform_6, window_bounds = array<i64: 1, 128>}, {transform_indices = @transform_7, window_bounds = array<i64: 8, 128>}]} {
    %c0 = arith.constant 0 : index
    %c0_0 = arith.constant 0 : index
    %0 = vector.load %arg1[%c0, %c0_0] : memref<8x32xf32, #tpu.memory_space<vmem>>, vector<8x32xf32>
    %c0_1 = arith.constant 0 : index
    %c0_2 = arith.constant 0 : index
    %1 = vector.load %arg2[%c0_1, %c0_2] : memref<32x256xf32, #tpu.memory_space<vmem>>, vector<32x256xf32>
    %cst = arith.constant dense<0.000000e+00> : vector<8x256xf32>
    %2 = tpu.matmul %0, %1, %cst {dimension_numbers = #tpu.dot_dimension_numbers<[1], [0], [0], [1], [0, 0, 1, 1], [], []>} : vector<8x32xf32>, vector<32x256xf32>, vector<8x256xf32> -> vector<8x256xf32>
    %c0_3 = arith.constant 0 : index
    %c0_4 = arith.constant 0 : index
    %3 = vector.load %arg3[%c0_3, %c0_4] : memref<1x256xf32, #tpu.memory_space<vmem>>, vector<1x256xf32>
    %4 = vector.broadcast %3 : vector<1x256xf32> to vector<8x256xf32>
    %5 = arith.addf %2, %4 : vector<8x256xf32>
    %cst_5 = arith.constant 0.000000e+00 : f32
    %6 = vector.broadcast %cst_5 : f32 to vector<8x256xf32>
    %7 = arith.maximumf %5, %6 : vector<8x256xf32>
    %c0_6 = arith.constant 0 : index
    %c0_7 = arith.constant 0 : index
    %8 = vector.load %arg4[%c0_6, %c0_7] : memref<256x256xf32, #tpu.memory_space<vmem>>, vector<256x256xf32>
    %cst_8 = arith.constant dense<0.000000e+00> : vector<8x256xf32>
    %9 = tpu.matmul %7, %8, %cst_8 {dimension_numbers = #tpu.dot_dimension_numbers<[1], [0], [0], [1], [0, 0, 1, 1], [], []>} : vector<8x256xf32>, vector<256x256xf32>, vector<8x256xf32> -> vector<8x256xf32>
    %c0_9 = arith.constant 0 : index
    %c0_10 = arith.constant 0 : index
    %10 = vector.load %arg5[%c0_9, %c0_10] : memref<1x256xf32, #tpu.memory_space<vmem>>, vector<1x256xf32>
    %11 = vector.broadcast %10 : vector<1x256xf32> to vector<8x256xf32>
    %12 = arith.addf %9, %11 : vector<8x256xf32>
    %cst_11 = arith.constant 0.000000e+00 : f32
    %13 = vector.broadcast %cst_11 : f32 to vector<8x256xf32>
    %14 = arith.maximumf %12, %13 : vector<8x256xf32>
    %c0_12 = arith.constant 0 : index
    %c0_13 = arith.constant 0 : index
    %15 = vector.load %arg6[%c0_12, %c0_13] : memref<256x128xf32, #tpu.memory_space<vmem>>, vector<256x128xf32>
    %cst_14 = arith.constant dense<0.000000e+00> : vector<8x128xf32>
    %16 = tpu.matmul %14, %15, %cst_14 {dimension_numbers = #tpu.dot_dimension_numbers<[1], [0], [0], [1], [0, 0, 1, 1], [], []>} : vector<8x256xf32>, vector<256x128xf32>, vector<8x128xf32> -> vector<8x128xf32>
    %c0_15 = arith.constant 0 : index
    %c0_16 = arith.constant 0 : index
    %17 = vector.load %arg7[%c0_15, %c0_16] : memref<1x128xf32, #tpu.memory_space<vmem>>, vector<1x128xf32>
    %18 = vector.broadcast %17 : vector<1x128xf32> to vector<8x128xf32>
    %19 = arith.addf %16, %18 : vector<8x128xf32>
    %20 = tpu.iota {dimensions = array<i32: 1>} : vector<8x128xi32>
    %c4_i32 = arith.constant 4 : i32
    %21 = vector.broadcast %c4_i32 : i32 to vector<8x128xi32>
    %22 = arith.cmpi slt, %20, %21 : vector<8x128xi32>
    %cst_17 = arith.constant 0xFF800000 : f32
    %23 = vector.broadcast %cst_17 : f32 to vector<8x128xf32>
    %24 = arith.select %22, %19, %23 : vector<8x128xi1>, vector<8x128xf32>
    %cst_18 = arith.constant dense<0xFF800000> : vector<8xf32>
    %25 = vector.multi_reduction <maximumf>, %24, %cst_18 [1] : vector<8x128xf32> to vector<8xf32>
    %26 = vector.shape_cast %25 : vector<8xf32> to vector<8x1xf32>
    %27 = vector.broadcast %26 : vector<8x1xf32> to vector<8x128xf32>
    %28 = arith.subf %24, %27 : vector<8x128xf32>
    %29 = math.exp %28 : vector<8x128xf32>
    %cst_19 = arith.constant 0.000000e+00 : f32
    %30 = vector.broadcast %cst_19 : f32 to vector<8x128xf32>
    %31 = arith.select %22, %29, %30 : vector<8x128xi1>, vector<8x128xf32>
    %cst_20 = arith.constant dense<0.000000e+00> : vector<8xf32>
    %32 = vector.multi_reduction <add>, %31, %cst_20 [1] : vector<8x128xf32> to vector<8xf32>
    %33 = vector.shape_cast %32 : vector<8xf32> to vector<8x1xf32>
    %34 = tpu.reciprocal %33 : vector<8x1xf32> -> vector<8x1xf32>
    %35 = vector.broadcast %34 : vector<8x1xf32> to vector<8x128xf32>
    %36 = arith.mulf %31, %35 : vector<8x128xf32>
    %c4_i32_21 = arith.constant 4 : i32
    %37 = vector.broadcast %c4_i32_21 : i32 to vector<8x128xi32>
    %38 = arith.cmpi eq, %20, %37 : vector<8x128xi32>
    %39 = arith.select %38, %19, %36 : vector<8x128xi1>, vector<8x128xf32>
    %c0_22 = arith.constant 0 : index
    %c0_23 = arith.constant 0 : index
    %40 = vector.load %arg8[%c0_22, %c0_23] : memref<8x128xf32, #tpu.memory_space<vmem>>, vector<8x128xf32>
    tpu.vector_store %arg8[%c0_22, %c0_23], %39 {strides = array<i32>} : memref<8x128xf32, #tpu.memory_space<vmem>>, vector<8x128xf32>,
    return
  }
  func.func @transform_0(%arg0: i32) -> (i32, i32) {
    %c0_i32 = arith.constant 0 : i32
    %c0_i32_0 = arith.constant 0 : i32
    return %arg0, %c0_i32 : i32, i32
  }
  func.func @transform_1(%arg0: i32) -> (i32, i32) {
    %c0_i32 = arith.constant 0 : i32
    %c0_i32_0 = arith.constant 0 : i32
    %c0_i32_1 = arith.constant 0 : i32
    return %c0_i32, %c0_i32_0 : i32, i32
  }
  func.func @transform_2(%arg0: i32) -> (i32, i32) {
    %c0_i32 = arith.constant 0 : i32
    %c0_i32_0 = arith.constant 0 : i32
    %c0_i32_1 = arith.constant 0 : i32
    return %c0_i32, %c0_i32_0 : i32, i32
  }
  func.func @transform_3(%arg0: i32) -> (i32, i32) {
    %c0_i32 = arith.constant 0 : i32
    %c0_i32_0 = arith.constant 0 : i32
    %c0_i32_1 = arith.constant 0 : i32
    return %c0_i32, %c0_i32_0 : i32, i32
  }
  func.func @transform_4(%arg0: i32) -> (i32, i32) {
    %c0_i32 = arith.constant 0 : i32
    %c0_i32_0 = arith.constant 0 : i32
    %c0_i32_1 = arith.constant 0 : i32
    return %c0_i32, %c0_i32_0 : i32, i32
  }
  func.func @transform_5(%arg0: i32) -> (i32, i32) {
    %c0_i32 = arith.constant 0 : i32
    %c0_i32_0 = arith.constant 0 : i32
    %c0_i32_1 = arith.constant 0 : i32
    return %c0_i32, %c0_i32_0 : i32, i32
  }
  func.func @transform_6(%arg0: i32) -> (i32, i32) {
    %c0_i32 = arith.constant 0 : i32
    %c0_i32_0 = arith.constant 0 : i32
    %c0_i32_1 = arith.constant 0 : i32
    return %c0_i32, %c0_i32_0 : i32, i32
  }
  func.func @transform_7(%arg0: i32) -> (i32, i32) {
    %c0_i32 = arith.constant 0 : i32
    %c0_i32_0 = arith.constant 0 : i32
    return %arg0, %c0_i32 : i32, i32
  }
}

</mosaic_0001>

<llo_original>
// kernel: tpu_custom_call.1
$region0: #{tpu_custom_call.1}
  #allocation0 [shape = 'u32[]', space=smem, size = 0x4, offset = 0x4, fixed_abs, tag = 'smem constant byte address 0x4 - core index']
  #allocation1 [shape = 'u32[72,128]{1,0:T(1,128)}', space=vmem, size = 0x9000, scoped, tag = 'internal scratch']
  %s0 = inlined_call_operand.hbm [shape: f32[16,32], index: 0, kind: input, shape index: {}]
  %s1 = inlined_call_operand.hbm [shape: f32[32,256], index: 1, kind: input, shape index: {}]
  %s2 = inlined_call_operand.hbm [shape: f32[1,256], index: 2, kind: input, shape index: {}]
  %s3 = inlined_call_operand.hbm [shape: f32[256,256], index: 3, kind: input, shape index: {}]
  %s4 = inlined_call_operand.vmem [shape: f32[1,256], index: 4, kind: input, shape index: {}]
  %s5 = inlined_call_operand.hbm [shape: f32[256,128], index: 5, kind: input, shape index: {}]
  %s6 = inlined_call_operand.vmem [shape: f32[1,128], index: 6, kind: input, shape index: {}]
  %s7 = inlined_call_operand.hbm [shape: f32[16,128], index: 7, kind: output, shape index: {}]
  %s8 = sld [smem:[#allocation0]]
  $region81: #{tpu_custom_call.1} parent=0
    _
  %s10 = ssub.s32 1, %s8
  %s11 = scalar_select 0, %s10, %s8
  $region1: #{tpu_custom_call.1} parent=0
    #allocation2 [shape = 'u8[8192]{0}', space=vmem, size = 0x2000, scoped, tag = 'input window, operand 0']
    #allocation3 [shape = 's32[2]{0}', space=sflag, size = 0x8, scoped, tag = 'scoped memory for tpu_custom_call.1']
    #allocation4 [shape = 's32[2]{0}', space=sflag, size = 0x8, scoped, tag = 'scoped memory for tpu_custom_call.1']
    #allocation5 [shape = 'u8[32768]{0}', space=vmem, size = 0x8000, scoped, tag = 'input window, operand 1, single buffered']
    #allocation6 [shape = 's32[1]{0}', space=sflag, size = 0x4, scoped, tag = 'scoped memory for tpu_custom_call.1']
    #allocation7 [shape = 'u8[1024]{0}', space=vmem, size = 0x400, scoped, tag = 'input window, operand 2, single buffered']
    #allocation8 [shape = 'u8[262144]{0}', space=vmem, size = 0x40000, scoped, tag = 'input window, operand 3, single buffered']
    #allocation9 [shape = 's32[1]{0}', space=sflag, size = 0x4, scoped, tag = 'scoped memory for tpu_custom_call.1']
    #allocation10 [shape = 'u8[131072]{0}', space=vmem, size = 0x20000, scoped, tag = 'input window, operand 5, single buffered']
    #allocation11 [shape = 'u8[8192]{0}', space=vmem, size = 0x2000, scoped, tag = 'output window, operand 0']
    %12 = vsyncpa [#allocation3], 0
    %s13 = scalar_lea.sflag [#allocation3], 1
    %14 = vsyncpa %s13, 0
    %15 = vsyncpa [#allocation6], 0
    %16 = vsyncpa [#allocation9], 0
    %17 = vsyncpa [#allocation4], 0
    %s18 = scalar_lea.sflag [#allocation4], 1
    %19 = vsyncpa %s18, 0
    loop: start=0, step=1, limit=4
    $region2: #{tpu_custom_call.1} parent=1 // loop_pre_header
      _
    $region3: #{tpu_custom_call.1} parent=1 // loop_header
      %s21 = sphi 0, %s25
      %p22 = scmp.ge.s32.totalorder %s21, 4
      %s31 = sphi 0, %s33
      %s34 = sphi 0, %s31
      %s35 = sphi 0, %s34
      %s51 = sphi 0, %s35
      %s55 = sphi 0, %s55
      %s57 = sphi 0, %s55
      %s58 = sphi 0, %s57
      %s72 = sphi 0, %s58
      %s76 = sphi 0, %s76
      %s78 = sphi 0, %s76
      %s79 = sphi 0, %s78
      %s93 = sphi 0, %s79
      %s97 = sphi 0, %s97
      %s99 = sphi 0, %s97
      %s100 = sphi 0, %s99
      %s114 = sphi 0, %s100
      %s118 = sphi 0, %s118
      %s120 = sphi 0, %s118
      %s121 = sphi 0, %s120
      %s135 = sphi 0, %s121
      %s139 = sphi 0, %s139
      %s141 = sphi 0, %s139
      %s142 = sphi 0, %s141
      %s156 = sphi 0, %s142
      %s160 = sphi 0, %s160
      %s162 = sphi 0, %s160
      %s163 = sphi 0, %s162
      %s177 = sphi 0, %s163
      %s183 = sphi 0, %s185
      %s186 = sphi 0, %s183
      %s187 = sphi 0, %s186
      %s203 = sphi 0, %s187
    $region4: #{tpu_custom_call.1} parent=1 // loop_header_branch
      %24 = sbr.rel (%p22) target = $region8
    $region5: #{tpu_custom_call.1} parent=1 // loop_body
      %s26 = ssub.s32 %s21, 1
      %s27 = ssub.s32 %s21, 2
      %s28 = sadd.s32 %s21, 1
      %s29 = ssub.s32 %s21, %s28
      %p30 = scmp.eq.s32.totalorder %s29, 0
      %s32 = sadd.s32 %s31, 1
      %s33 = scalar_select %p30, %s31, %s32
      %p36 = pneg %p30
      %p37 = scmp.eq.s32.totalorder %s21, 1
      %p38 = por %p36, %p37
      %p39 = scmp.ne.s32.totalorder %s31, %s34
      %p40 = scmp.eq.s32.totalorder %s21, 0
      %p41 = por %p39, %p40
      %p42 = scmp.ne.s32.totalorder %s31, %s34
      %p43 = scmp.eq.s32.totalorder %s26, 1
      %p44 = por %p42, %p43
      %p45 = scmp.ne.s32.totalorder %s34, %s35
      %p46 = scmp.eq.s32.totalorder %s26, 0
      %p47 = por %p45, %p46
      %p48 = scmp.ne.s32.totalorder %s34, %s35
      %p49 = scmp.eq.s32.totalorder %s27, 1
      %p50 = por %p48, %p49
      %p52 = scmp.ne.s32.totalorder %s35, %s51
      %p53 = scmp.eq.s32.totalorder %s27, 0
      %p54 = por %p52, %p53
      %s56 = sadd.s32 %s55, 1
      %p59 = scmp.eq.s32.totalorder %s21, 1
      %p60 = scmp.ne.s32.totalorder %s55, %s57
      %p61 = scmp.eq.s32.totalorder %s21, 0
      %p62 = por %p60, %p61
      %p63 = scmp.ne.s32.totalorder %s55, %s57
      %p64 = scmp.eq.s32.totalorder %s26, 1
      %p65 = por %p63, %p64
      %p66 = scmp.ne.s32.totalorder %s57, %s58
      %p67 = scmp.eq.s32.totalorder %s26, 0
      %p68 = por %p66, %p67
      %p69 = scmp.ne.s32.totalorder %s57, %s58
      %p70 = scmp.eq.s32.totalorder %s27, 1
      %p71 = por %p69, %p70
      %p73 = scmp.ne.s32.totalorder %s58, %s72
      %p74 = scmp.eq.s32.totalorder %s27, 0
      %p75 = por %p73, %p74
      %s77 = sadd.s32 %s76, 1
      %p80 = scmp.eq.s32.totalorder %s21, 1
      %p81 = scmp.ne.s32.totalorder %s76, %s78
      %p82 = scmp.eq.s32.totalorder %s21, 0
      %p83 = por %p81, %p82
      %p84 = scmp.ne.s32.totalorder %s76, %s78
      %p85 = scmp.eq.s32.totalorder %s26, 1
      %p86 = por %p84, %p85
      %p87 = scmp.ne.s32.totalorder %s78, %s79
      %p88 = scmp.eq.s32.totalorder %s26, 0
      %p89 = por %p87, %p88
      %p90 = scmp.ne.s32.totalorder %s78, %s79
      %p91 = scmp.eq.s32.totalorder %s27, 1
      %p92 = por %p90, %p91
      %p94 = scmp.ne.s32.totalorder %s79, %s93
      %p95 = scmp.eq.s32.totalorder %s27, 0
      %p96 = por %p94, %p95
      %s98 = sadd.s32 %s97, 1
      %p101 = scmp.eq.s32.totalorder %s21, 1
      %p102 = scmp.ne.s32.totalorder %s97, %s99
      %p103 = scmp.eq.s32.totalorder %s21, 0
      %p104 = por %p102, %p103
      %p105 = scmp.ne.s32.totalorder %s97, %s99
      %p106 = scmp.eq.s32.totalorder %s26, 1
      %p107 = por %p105, %p106
      %p108 = scmp.ne.s32.totalorder %s99, %s100
      %p109 = scmp.eq.s32.totalorder %s26, 0
      %p110 = por %p108, %p109
      %p111 = scmp.ne.s32.totalorder %s99, %s100
      %p112 = scmp.eq.s32.totalorder %s27, 1
      %p113 = por %p111, %p112
      %p115 = scmp.ne.s32.totalorder %s100, %s114
      %p116 = scmp.eq.s32.totalorder %s27, 0
      %p117 = por %p115, %p116
      %s119 = sadd.s32 %s118, 1
      %p122 = scmp.eq.s32.totalorder %s21, 1
      %p123 = scmp.ne.s32.totalorder %s118, %s120
      %p124 = scmp.eq.s32.totalorder %s21, 0
      %p125 = por %p123, %p124
      %p126 = scmp.ne.s32.totalorder %s118, %s120
      %p127 = scmp.eq.s32.totalorder %s26, 1
      %p128 = por %p126, %p127
      %p129 = scmp.ne.s32.totalorder %s120, %s121
      %p130 = scmp.eq.s32.totalorder %s26, 0
      %p131 = por %p129, %p130
      %p132 = scmp.ne.s32.totalorder %s120, %s121
      %p133 = scmp.eq.s32.totalorder %s27, 1
      %p134 = por %p132, %p133
      %p136 = scmp.ne.s32.totalorder %s121, %s135
      %p137 = scmp.eq.s32.totalorder %s27, 0
      %p138 = por %p136, %p137
      %s140 = sadd.s32 %s139, 1
      %p143 = scmp.eq.s32.totalorder %s21, 1
      %p144 = scmp.ne.s32.totalorder %s139, %s141
      %p145 = scmp.eq.s32.totalorder %s21, 0
      %p146 = por %p144, %p145
      %p147 = scmp.ne.s32.totalorder %s139, %s141
      %p148 = scmp.eq.s32.totalorder %s26, 1
      %p149 = por %p147, %p148
      %p150 = scmp.ne.s32.totalorder %s141, %s142
      %p151 = scmp.eq.s32.totalorder %s26, 0
      %p152 = por %p150, %p151
      %p153 = scmp.ne.s32.totalorder %s141, %s142
      %p154 = scmp.eq.s32.totalorder %s27, 1
      %p155 = por %p153, %p154
      %p157 = scmp.ne.s32.totalorder %s142, %s156
      %p158 = scmp.eq.s32.totalorder %s27, 0
      %p159 = por %p157, %p158
      %s161 = sadd.s32 %s160, 1
      %p164 = scmp.eq.s32.totalorder %s21, 1
      %p165 = scmp.ne.s32.totalorder %s160, %s162
      %p166 = scmp.eq.s32.totalorder %s21, 0
      %p167 = por %p165, %p166
      %p168 = scmp.ne.s32.totalorder %s160, %s162
      %p169 = scmp.eq.s32.totalorder %s26, 1
      %p170 = por %p168, %p169
      %p171 = scmp.ne.s32.totalorder %s162, %s163
      %p172 = scmp.eq.s32.totalorder %s26, 0
      %p173 = por %p171, %p172
      %p174 = scmp.ne.s32.totalorder %s162, %s163
      %p175 = scmp.eq.s32.totalorder %s27, 1
      %p176 = por %p174, %p175
      %p178 = scmp.ne.s32.totalorder %s163, %s177
      %p179 = scmp.eq.s32.totalorder %s27, 0
      %p180 = por %p178, %p179
      %s181 = ssub.s32 %s21, %s28
      %p182 = scmp.eq.s32.totalorder %s181, 0
      %s184 = sadd.s32 %s183, 1
      %s185 = scalar_select %p182, %s183, %s184
      %p188 = pneg %p182
      %p189 = scmp.eq.s32.totalorder %s21, 1
      %p190 = por %p188, %p189
      %p191 = scmp.ne.s32.totalorder %s183, %s186
      %p192 = scmp.eq.s32.totalorder %s21, 0
      %p193 = por %p191, %p192
      %p194 = scmp.ne.s32.totalorder %s183, %s186
      %p195 = scmp.eq.s32.totalorder %s26, 1
      %p196 = por %p194, %p195
      %p197 = scmp.ne.s32.totalorder %s186, %s187
      %p198 = scmp.eq.s32.totalorder %s26, 0
      %p199 = por %p197, %p198
      %p200 = scmp.ne.s32.totalorder %s186, %s187
      %p201 = scmp.eq.s32.totalorder %s27, 1
      %p202 = por %p200, %p201
      %p204 = scmp.ne.s32.totalorder %s187, %s203
      %p205 = scmp.eq.s32.totalorder %s27, 0
      %p206 = por %p204, %p205
      %p207 = scmp.le.s32.totalorder 1, %s21
      %p208 = scmp.lt.s32.totalorder %s21, 3
      %p209 = pnand %p207, %p208
      %p210 = pneg %p209
      // Predicated region
      $region9: #{tpu_custom_call.1} parent=5 // pred_check
        _
      $region10: #{tpu_custom_call.1} parent=5 // pred_check_branch
        %212 = sbr.rel (%p209) target = $region12
      $region11: #{tpu_custom_call.1} parent=5 // pred_region
        %s213 = ssub.s32 %s21, 1
        // Predicated region
        $region13: #{tpu_custom_call.1} parent=11 // pred_check
          %p214 = pneg %p68
        $region14: #{tpu_custom_call.1} parent=11 // pred_check_branch
          %216 = sbr.rel (%p214) target = $region16
        $region15: #{tpu_custom_call.1} parent=11 // pred_region
          %218 = vsyncadd [#allocation6], 0
          %s219 = sshll.u32 %s1, 4
          %s220 = int_to_ptr.hbm [resolvable:$true] %s219
          %s221 = sshll.u32 [#allocation5], 4
          %s222 = int_to_ptr.vmem [resolvable:$true] %s221
          %227 = dma.hbm_to_vmem [thread:$0]  %s220, 1024, %s222, [#allocation6], 256, 256, 16
        $region16: #{tpu_custom_call.1} parent=11 // pred_fallthru
          _
        // Predicated region
        $region17: #{tpu_custom_call.1} parent=11 // pred_check
          %p228 = pneg %p89
        $region18: #{tpu_custom_call.1} parent=11 // pred_check_branch
          %230 = sbr.rel (%p228) target = $region20
        $region19: #{tpu_custom_call.1} parent=11 // pred_region
          %232 = vsyncadd [#allocation6], 0
          %s234 = sshll.u32 %s2, 4
          %s235 = int_to_ptr.hbm [resolvable:$true] %s234
          %s236 = sshll.u32 [#allocation7], 4
          %s237 = int_to_ptr.vmem [resolvable:$true] %s236
          %239 = dma.hbm_to_vmem [thread:$0]  %s235, 32, %s237, [#allocation6]
        $region20: #{tpu_custom_call.1} parent=11 // pred_fallthru
          _
        // Predicated region
        $region21: #{tpu_custom_call.1} parent=11 // pred_check
          %p240 = pneg %p110
        $region22: #{tpu_custom_call.1} parent=11 // pred_check_branch
          %242 = sbr.rel (%p240) target = $region24
        $region23: #{tpu_custom_call.1} parent=11 // pred_region
          %244 = vsyncadd [#allocation9], 0
          %s245 = sshll.u32 %s3, 4
          %s246 = int_to_ptr.hbm [resolvable:$true] %s245
          %s247 = sshll.u32 [#allocation8], 4
          %s248 = int_to_ptr.vmem [resolvable:$true] %s247
          %253 = dma.hbm_to_vmem [thread:$0]  %s246, 8192, %s248, [#allocation9], 256, 256, 16
        $region24: #{tpu_custom_call.1} parent=11 // pred_fallthru
          _
        // Predicated region
        $region25: #{tpu_custom_call.1} parent=11 // pred_check
          %p254 = pneg %p131
        $region26: #{tpu_custom_call.1} parent=11 // pred_check_branch
          %256 = sbr.rel (%p254) target = $region28
        $region27: #{tpu_custom_call.1} parent=11 // pred_region
          _
        $region28: #{tpu_custom_call.1} parent=11 // pred_fallthru
          _
        // Predicated region
        $region29: #{tpu_custom_call.1} parent=11 // pred_check
          %p257 = pneg %p152
        $region30: #{tpu_custom_call.1} parent=11 // pred_check_branch
          %259 = sbr.rel (%p257) target = $region32
        $region31: #{tpu_custom_call.1} parent=11 // pred_region
          %261 = vsyncadd [#allocation9], 0
          %s262 = sshll.u32 %s5, 4
          %s263 = int_to_ptr.hbm [resolvable:$true] %s262
          %s264 = sshll.u32 [#allocation10], 4
          %s265 = int_to_ptr.vmem [resolvable:$true] %s264
          %270 = dma.hbm_to_vmem [thread:$0]  %s263, 4096, %s265, [#allocation9], 128, 128, 8
        $region32: #{tpu_custom_call.1} parent=11 // pred_fallthru
          _
        // Predicated region
        $region33: #{tpu_custom_call.1} parent=11 // pred_check
          %p271 = pneg %p173
        $region34: #{tpu_custom_call.1} parent=11 // pred_check_branch
          %273 = sbr.rel (%p271) target = $region36
        $region35: #{tpu_custom_call.1} parent=11 // pred_region
          _
        $region36: #{tpu_custom_call.1} parent=11 // pred_fallthru
          _
      $region12: #{tpu_custom_call.1} parent=5 // pred_fallthru
        _
      %p274 = scmp.lt.s32.totalorder %s21, 2
      // Predicated region
      $region37: #{tpu_custom_call.1} parent=5 // pred_check
        %p275 = pneg %p274
      $region38: #{tpu_custom_call.1} parent=5 // pred_check_branch
        %277 = sbr.rel (%p275) target = $region40
      $region39: #{tpu_custom_call.1} parent=5 // pred_region
        // Predicated region
        $region41: #{tpu_custom_call.1} parent=39 // pred_check
          %p278 = pneg %p41
        $region42: #{tpu_custom_call.1} parent=39 // pred_check_branch
          %280 = sbr.rel (%p278) target = $region44
        $region43: #{tpu_custom_call.1} parent=39 // pred_region
          %s281 = sand.u32 %s31, 1
          %s282 = scalar_lea.sflag [#allocation3], %s281
          %s283 = sand.u32 %s31, 1
          %s284 = smul.addr %s283, 8
          %s285 = scalar_lea.vmem [#allocation2], %s284
          %287 = vsyncadd %s282, 0
          %s288 = smul.addr %s21, 8
          %s289 = scalar_lea.hbm %s0, %s288
          %s291 = sshll.u32 %s289, 4
          %s292 = int_to_ptr.hbm [resolvable:$true] %s291
          %s293 = sshll.u32 %s285, 4
          %s294 = int_to_ptr.vmem [resolvable:$true] %s293
          %296 = dma.hbm_to_vmem [thread:$0]  %s292, 128, %s294, %s282
        $region44: #{tpu_custom_call.1} parent=39 // pred_fallthru
          _
      $region40: #{tpu_custom_call.1} parent=5 // pred_fallthru
        _
      %p297 = scmp.le.s32.totalorder 1, %s21
      %p298 = scmp.lt.s32.totalorder %s21, 3
      %p299 = pnand %p297, %p298
      %p300 = pneg %p299
      // Predicated region
      $region45: #{tpu_custom_call.1} parent=5 // pred_check
        _
      $region46: #{tpu_custom_call.1} parent=5 // pred_check_branch
        %302 = sbr.rel (%p299) target = $region48
      $region47: #{tpu_custom_call.1} parent=5 // pred_region
        %s303 = ssub.s32 %s21, 1
        %s304 = sand.u32 %s34, 1
        %s305 = scalar_lea.sflag [#allocation3], %s304
        %s306 = sand.u32 %s34, 1
        %s307 = smul.addr %s306, 8
        %s308 = scalar_lea.vmem [#allocation2], %s307
        // Predicated region
        $region49: #{tpu_custom_call.1} parent=47 // pred_check
          %p309 = pneg %p47
        $region50: #{tpu_custom_call.1} parent=47 // pred_check_branch
          %311 = sbr.rel (%p309) target = $region52
        $region51: #{tpu_custom_call.1} parent=47 // pred_region
          %313 = dma.done %s305, 128
        $region52: #{tpu_custom_call.1} parent=47 // pred_fallthru
          _
        // Predicated region
        $region53: #{tpu_custom_call.1} parent=47 // pred_check
          %p314 = pneg %p68
        $region54: #{tpu_custom_call.1} parent=47 // pred_check_branch
          %316 = sbr.rel (%p314) target = $region56
        $region55: #{tpu_custom_call.1} parent=47 // pred_region
          %318 = dma.done [#allocation6], 1024
        $region56: #{tpu_custom_call.1} parent=47 // pred_fallthru
          _
        // Predicated region
        $region57: #{tpu_custom_call.1} parent=47 // pred_check
          %p319 = pneg %p89
        $region58: #{tpu_custom_call.1} parent=47 // pred_check_branch
          %321 = sbr.rel (%p319) target = $region60
        $region59: #{tpu_custom_call.1} parent=47 // pred_region
          %323 = dma.done [#allocation6], 32
        $region60: #{tpu_custom_call.1} parent=47 // pred_fallthru
          _
        // Predicated region
        $region61: #{tpu_custom_call.1} parent=47 // pred_check
          %p324 = pneg %p110
        $region62: #{tpu_custom_call.1} parent=47 // pred_check_branch
          %326 = sbr.rel (%p324) target = $region64
        $region63: #{tpu_custom_call.1} parent=47 // pred_region
          %328 = dma.done [#allocation9], 8192
        $region64: #{tpu_custom_call.1} parent=47 // pred_fallthru
          _
        // Predicated region
        $region65: #{tpu_custom_call.1} parent=47 // pred_check
          %p329 = pneg %p152
        $region66: #{tpu_custom_call.1} parent=47 // pred_check_branch
          %331 = sbr.rel (%p329) target = $region68
        $region67: #{tpu_custom_call.1} parent=47 // pred_region
          %333 = dma.done [#allocation9], 4096
        $region68: #{tpu_custom_call.1} parent=47 // pred_fallthru
          _
        %s334 = sand.u32 %s34, 1
        %s335 = scalar_lea.sflag [#allocation3], %s334
        %s336 = sand.u32 %s34, 1
        %s337 = smul.addr %s336, 8
        %s338 = scalar_lea.vmem [#allocation2], %s337
        %p339 = pneg %p47
        %p340 = pneg %p44
        %p341 = pneg %p68
        %p342 = pneg %p65
        %p343 = pneg %p89
        %p344 = pneg %p86
        %p345 = pneg %p110
        %p346 = pneg %p107
        %p347 = pneg %p131
        %p348 = pneg %p128
        %p349 = pneg %p152
        %p350 = pneg %p149
        %p351 = pneg %p173
        %p352 = pneg %p170
        %p353 = pneg %p199
        %p354 = pneg %p196
        %s355 = sand.u32 %s186, 1
        %s356 = scalar_lea.sflag [#allocation4], %s355
        %s357 = sand.u32 %s186, 1
        %s358 = smul.addr %s357, 8
        %s359 = scalar_lea.vmem [#allocation11], %s358
        %v360 = vld [vmem:[%s308] sm:$0xff]
        %v361 = vld [vmem:[#allocation5] sm:$0xff]
        %v362 = vld [vmem:[#allocation5 + $0x8] sm:$0xff]
        %v363 = vld [vmem:[#allocation5 + $0x10] sm:$0xff]
        %v364 = vld [vmem:[#allocation5 + $0x18] sm:$0xff]
        %v365 = vld [vmem:[#allocation5 + $0x20] sm:$0xff]
        %v366 = vld [vmem:[#allocation5 + $0x28] sm:$0xff]
        %v367 = vld [vmem:[#allocation5 + $0x30] sm:$0xff]
        %v368 = vld [vmem:[#allocation5 + $0x38] sm:$0xff]
        %v369 = vld [vmem:[#allocation7] sm:$0x3]
        %v371 = vperm.slane %v369, 0
        %v372 = vperm.slane %v369, 1
        %vm375 = vcmask 261120
        %v377 = vsel %vm375, %v360, 0
        %379 = vmatpush.msra.mxu0 0.0
        %380 = vmatpush.msra.mxu0 0.0
        %381 = vmatpush.msra.mxu0 0.0
        %382 = vmatpush.msra.mxu0 0.0
        %383 = vmatpush.msra.mxu0 0.0
        %384 = vmatpush.msra.mxu0 0.0
        %385 = vmatpush.msra.mxu0 0.0
        %386 = vmatpush.msra.mxu0 0.0
        %387 = vmatpush.msra.mxu0 0.0
        %388 = vmatpush.msra.mxu0 0.0
        %389 = vmatpush.msra.mxu0 0.0
        %390 = vmatpush.msra.mxu0 0.0
        %391 = vmatpush.msra.mxu0 %v367
        %392 = vmatpush.msra.mxu0 %v365
        %393 = vmatpush.msra.mxu0 %v363
        %394 = vmatpush.msra.mxu0 %v361
        %395 = vmatmul.f32.gmra.mxu0 %v377
        %v396 = vpop.f32.mrf.mxu0
        %v397 = vadd.f32 %v371, %v396
        %398 = vdwg.mxu0
        %399 = vmatpush.msra.mxu0 0.0
        %400 = vmatpush.msra.mxu0 0.0
        %401 = vmatpush.msra.mxu0 0.0
        %402 = vmatpush.msra.mxu0 0.0
        %403 = vmatpush.msra.mxu0 0.0
        %404 = vmatpush.msra.mxu0 0.0
        %405 = vmatpush.msra.mxu0 0.0
        %406 = vmatpush.msra.mxu0 0.0
        %407 = vmatpush.msra.mxu0 0.0
        %408 = vmatpush.msra.mxu0 0.0
        %409 = vmatpush.msra.mxu0 0.0
        %410 = vmatpush.msra.mxu0 0.0
        %411 = vmatpush.msra.mxu0 %v368
        %412 = vmatpush.msra.mxu0 %v366
        %413 = vmatpush.msra.mxu0 %v364
        %414 = vmatpush.msra.mxu0 %v362
        %415 = vmatmul.f32.gmra.mxu0 %v377
        %v416 = vpop.f32.mrf.mxu0
        %v417 = vadd.f32 %v372, %v416
        %418 = vdwg.mxu0
        %v419 = vmax.f32 %v397, 0.0
        %v420 = vmax.f32 %v417, 0.0
        %v421 = vld [vmem:[#allocation8] sm:$0xff]
        %v422 = vld [vmem:[#allocation8 + $0x8] sm:$0xff]
        %v423 = vld [vmem:[#allocation8 + $0x10] sm:$0xff]
        %v424 = vld [vmem:[#allocation8 + $0x18] sm:$0xff]
        %v425 = vld [vmem:[#allocation8 + $0x20] sm:$0xff]
        %v426 = vld [vmem:[#allocation8 + $0x28] sm:$0xff]
        %v427 = vld [vmem:[#allocation8 + $0x30] sm:$0xff]
        %v428 = vld [vmem:[#allocation8 + $0x38] sm:$0xff]
        %v429 = vld [vmem:[#allocation8 + $0x40] sm:$0xff]
        %v430 = vld [vmem:[#allocation8 + $0x48] sm:$0xff]
        %v431 = vld [vmem:[#allocation8 + $0x50] sm:$0xff]
        %v432 = vld [vmem:[#allocation8 + $0x58] sm:$0xff]
        %v433 = vld [vmem:[#allocation8 + $0x60] sm:$0xff]
        %v434 = vld [vmem:[#allocation8 + $0x68] sm:$0xff]
        %v435 = vld [vmem:[#allocation8 + $0x70] sm:$0xff]
        %v436 = vld [vmem:[#allocation8 + $0x78] sm:$0xff]
        %v437 = vld [vmem:[#allocation8 + $0x80] sm:$0xff]
        %v438 = vld [vmem:[#allocation8 + $0x88] sm:$0xff]
        %v439 = vld [vmem:[#allocation8 + $0x90] sm:$0xff]
        %v440 = vld [vmem:[#allocation8 + $0x98] sm:$0xff]
        %v441 = vld [vmem:[#allocation8 + $0xa0] sm:$0xff]
        %v442 = vld [vmem:[#allocation8 + $0xa8] sm:$0xff]
        %v443 = vld [vmem:[#allocation8 + $0xb0] sm:$0xff]
        %v444 = vld [vmem:[#allocation8 + $0xb8] sm:$0xff]
        %v445 = vld [vmem:[#allocation8 + $0xc0] sm:$0xff]
        %v446 = vld [vmem:[#allocation8 + $0xc8] sm:$0xff]
        %v447 = vld [vmem:[#allocation8 + $0xd0] sm:$0xff]
        %v448 = vld [vmem:[#allocation8 + $0xd8] sm:$0xff]
        %v449 = vld [vmem:[#allocation8 + $0xe0] sm:$0xff]
        %v450 = vld [vmem:[#allocation8 + $0xe8] sm:$0xff]
        %v451 = vld [vmem:[#allocation8 + $0xf0] sm:$0xff]
        %v452 = vld [vmem:[#allocation8 + $0xf8] sm:$0xff]
        %v453 = vld [vmem:[#allocation8 + $0x100] sm:$0xff]
        %v454 = vld [vmem:[#allocation8 + $0x108] sm:$0xff]
        %v455 = vld [vmem:[#allocation8 + $0x110] sm:$0xff]
        %v456 = vld [vmem:[#allocation8 + $0x118] sm:$0xff]
        %v457 = vld [vmem:[#allocation8 + $0x120] sm:$0xff]
        %v458 = vld [vmem:[#allocation8 + $0x128] sm:$0xff]
        %v459 = vld [vmem:[#allocation8 + $0x130] sm:$0xff]
        %v460 = vld [vmem:[#allocation8 + $0x138] sm:$0xff]
        %v461 = vld [vmem:[#allocation8 + $0x140] sm:$0xff]
        %v462 = vld [vmem:[#allocation8 + $0x148] sm:$0xff]
        %v463 = vld [vmem:[#allocation8 + $0x150] sm:$0xff]
        %v464 = vld [vmem:[#allocation8 + $0x158] sm:$0xff]
        %v465 = vld [vmem:[#allocation8 + $0x160] sm:$0xff]
        %v466 = vld [vmem:[#allocation8 + $0x168] sm:$0xff]
        %v467 = vld [vmem:[#allocation8 + $0x170] sm:$0xff]
        %v468 = vld [vmem:[#allocation8 + $0x178] sm:$0xff]
        %v469 = vld [vmem:[#allocation8 + $0x180] sm:$0xff]
        %v470 = vld [vmem:[#allocation8 + $0x188] sm:$0xff]
        %v471 = vld [vmem:[#allocation8 + $0x190] sm:$0xff]
        %v472 = vld [vmem:[#allocation8 + $0x198] sm:$0xff]
        %v473 = vld [vmem:[#allocation8 + $0x1a0] sm:$0xff]
        %v474 = vld [vmem:[#allocation8 + $0x1a8] sm:$0xff]
        %v475 = vld [vmem:[#allocation8 + $0x1b0] sm:$0xff]
        %v476 = vld [vmem:[#allocation8 + $0x1b8] sm:$0xff]
        %v477 = vld [vmem:[#allocation8 + $0x1c0] sm:$0xff]
        %v478 = vld [vmem:[#allocation8 + $0x1c8] sm:$0xff]
        %v479 = vld [vmem:[#allocation8 + $0x1d0] sm:$0xff]
        %v480 = vld [vmem:[#allocation8 + $0x1d8] sm:$0xff]
        %v481 = vld [vmem:[#allocation8 + $0x1e0] sm:$0xff]
        %v482 = vld [vmem:[#allocation8 + $0x1e8] sm:$0xff]
        %v483 = vld [vmem:[#allocation8 + $0x1f0] sm:$0xff]
        %v484 = vld [vmem:[#allocation8 + $0x1f8] sm:$0xff]
        %v485 = vld [vmem:[%s4] sm:$0x3]
        %v487 = vperm.slane %v485, 0
        %v488 = vperm.slane %v485, 1
        %491 = vmatpush.msra.mxu0 %v451
        %492 = vmatpush.msra.mxu0 %v449
        %493 = vmatpush.msra.mxu0 %v447
        %494 = vmatpush.msra.mxu0 %v445
        %495 = vmatpush.msra.mxu0 %v443
        %496 = vmatpush.msra.mxu0 %v441
        %497 = vmatpush.msra.mxu0 %v439
        %498 = vmatpush.msra.mxu0 %v437
        %499 = vmatpush.msra.mxu0 %v435
        %500 = vmatpush.msra.mxu0 %v433
        %501 = vmatpush.msra.mxu0 %v431
        %502 = vmatpush.msra.mxu0 %v429
        %503 = vmatpush.msra.mxu0 %v427
        %504 = vmatpush.msra.mxu0 %v425
        %505 = vmatpush.msra.mxu0 %v423
        %506 = vmatpush.msra.mxu0 %v421
        %507 = vmatmul.f32.gmra.mxu0 %v419
        %v508 = vpop.f32.mrf.mxu0
        %v509 = vadd.f32 %v487, %v508
        %510 = vdwg.mxu0
        %511 = vmatpush.msra.mxu0 %v483
        %512 = vmatpush.msra.mxu0 %v481
        %513 = vmatpush.msra.mxu0 %v479
        %514 = vmatpush.msra.mxu0 %v477
        %515 = vmatpush.msra.mxu0 %v475
        %516 = vmatpush.msra.mxu0 %v473
        %517 = vmatpush.msra.mxu0 %v471
        %518 = vmatpush.msra.mxu0 %v469
        %519 = vmatpush.msra.mxu0 %v467
        %520 = vmatpush.msra.mxu0 %v465
        %521 = vmatpush.msra.mxu0 %v463
        %522 = vmatpush.msra.mxu0 %v461
        %523 = vmatpush.msra.mxu0 %v459
        %524 = vmatpush.msra.mxu0 %v457
        %525 = vmatpush.msra.mxu0 %v455
        %526 = vmatpush.msra.mxu0 %v453
        %527 = vmatmul.f32.gmra.mxu0 %v420
        %v528 = vpop.f32.mrf.mxu0
        %v529 = vadd.f32 %v509, %v528
        %530 = vdwg.mxu0
        %531 = vmatpush.msra.mxu0 %v452
        %532 = vmatpush.msra.mxu0 %v450
        %533 = vmatpush.msra.mxu0 %v448
        %534 = vmatpush.msra.mxu0 %v446
        %535 = vmatpush.msra.mxu0 %v444
        %536 = vmatpush.msra.mxu0 %v442
        %537 = vmatpush.msra.mxu0 %v440
        %538 = vmatpush.msra.mxu0 %v438
        %539 = vmatpush.msra.mxu0 %v436
        %540 = vmatpush.msra.mxu0 %v434
        %541 = vmatpush.msra.mxu0 %v432
        %542 = vmatpush.msra.mxu0 %v430
        %543 = vmatpush.msra.mxu0 %v428
        %544 = vmatpush.msra.mxu0 %v426
        %545 = vmatpush.msra.mxu0 %v424
        %546 = vmatpush.msra.mxu0 %v422
        %547 = vmatmul.f32.gmra.mxu0 %v419
        %v548 = vpop.f32.mrf.mxu0
        %v549 = vadd.f32 %v488, %v548
        %550 = vdwg.mxu0
        %551 = vmatpush.msra.mxu0 %v484
        %552 = vmatpush.msra.mxu0 %v482
        %553 = vmatpush.msra.mxu0 %v480
        %554 = vmatpush.msra.mxu0 %v478
        %555 = vmatpush.msra.mxu0 %v476
        %556 = vmatpush.msra.mxu0 %v474
        %557 = vmatpush.msra.mxu0 %v472
        %558 = vmatpush.msra.mxu0 %v470
        %559 = vmatpush.msra.mxu0 %v468
        %560 = vmatpush.msra.mxu0 %v466
        %561 = vmatpush.msra.mxu0 %v464
        %562 = vmatpush.msra.mxu0 %v462
        %563 = vmatpush.msra.mxu0 %v460
        %564 = vmatpush.msra.mxu0 %v458
        %565 = vmatpush.msra.mxu0 %v456
        %566 = vmatpush.msra.mxu0 %v454
        %567 = vmatmul.f32.gmra.mxu0 %v420
        %v568 = vpop.f32.mrf.mxu0
        %v569 = vadd.f32 %v549, %v568
        %570 = vdwg.mxu0
        %v571 = vmax.f32 %v529, 0.0
        %v572 = vmax.f32 %v569, 0.0
        %v573 = vld [vmem:[#allocation10] sm:$0xff]
        %v574 = vld [vmem:[#allocation10 + $0x8] sm:$0xff]
        %v575 = vld [vmem:[#allocation10 + $0x10] sm:$0xff]
        %v576 = vld [vmem:[#allocation10 + $0x18] sm:$0xff]
        %v577 = vld [vmem:[#allocation10 + $0x20] sm:$0xff]
        %v578 = vld [vmem:[#allocation10 + $0x28] sm:$0xff]
        %v579 = vld [vmem:[#allocation10 + $0x30] sm:$0xff]
        %v580 = vld [vmem:[#allocation10 + $0x38] sm:$0xff]
        %v581 = vld [vmem:[#allocation10 + $0x40] sm:$0xff]
        %v582 = vld [vmem:[#allocation10 + $0x48] sm:$0xff]
        %v583 = vld [vmem:[#allocation10 + $0x50] sm:$0xff]
        %v584 = vld [vmem:[#allocation10 + $0x58] sm:$0xff]
        %v585 = vld [vmem:[#allocation10 + $0x60] sm:$0xff]
        %v586 = vld [vmem:[#allocation10 + $0x68] sm:$0xff]
        %v587 = vld [vmem:[#allocation10 + $0x70] sm:$0xff]
        %v588 = vld [vmem:[#allocation10 + $0x78] sm:$0xff]
        %v589 = vld [vmem:[#allocation10 + $0x80] sm:$0xff]
        %v590 = vld [vmem:[#allocation10 + $0x88] sm:$0xff]
        %v591 = vld [vmem:[#allocation10 + $0x90] sm:$0xff]
        %v592 = vld [vmem:[#allocation10 + $0x98] sm:$0xff]
        %v593 = vld [vmem:[#allocation10 + $0xa0] sm:$0xff]
        %v594 = vld [vmem:[#allocation10 + $0xa8] sm:$0xff]
        %v595 = vld [vmem:[#allocation10 + $0xb0] sm:$0xff]
        %v596 = vld [vmem:[#allocation10 + $0xb8] sm:$0xff]
        %v597 = vld [vmem:[#allocation10 + $0xc0] sm:$0xff]
        %v598 = vld [vmem:[#allocation10 + $0xc8] sm:$0xff]
        %v599 = vld [vmem:[#allocation10 + $0xd0] sm:$0xff]
        %v600 = vld [vmem:[#allocation10 + $0xd8] sm:$0xff]
        %v601 = vld [vmem:[#allocation10 + $0xe0] sm:$0xff]
        %v602 = vld [vmem:[#allocation10 + $0xe8] sm:$0xff]
        %v603 = vld [vmem:[#allocation10 + $0xf0] sm:$0xff]
        %v604 = vld [vmem:[#allocation10 + $0xf8] sm:$0xff]
        %v605 = vld [vmem:[%s6] sm:$0x1]
        %v607 = vperm.slane %v605, 0
        %609 = vmatpush.msra.mxu0 %v588
        %610 = vmatpush.msra.mxu0 %v587
        %611 = vmatpush.msra.mxu0 %v586
        %612 = vmatpush.msra.mxu0 %v585
        %613 = vmatpush.msra.mxu0 %v584
        %614 = vmatpush.msra.mxu0 %v583
        %615 = vmatpush.msra.mxu0 %v582
        %616 = vmatpush.msra.mxu0 %v581
        %617 = vmatpush.msra.mxu0 %v580
        %618 = vmatpush.msra.mxu0 %v579
        %619 = vmatpush.msra.mxu0 %v578
        %620 = vmatpush.msra.mxu0 %v577
        %621 = vmatpush.msra.mxu0 %v576
        %622 = vmatpush.msra.mxu0 %v575
        %623 = vmatpush.msra.mxu0 %v574
        %624 = vmatpush.msra.mxu0 %v573
        %625 = vmatmul.f32.gmra.mxu0 %v571
        %v626 = vpop.f32.mrf.mxu0
        %v627 = vadd.f32 %v607, %v626
        %628 = vdwg.mxu0
        %629 = vmatpush.msra.mxu0 %v604
        %630 = vmatpush.msra.mxu0 %v603
        %631 = vmatpush.msra.mxu0 %v602
        %632 = vmatpush.msra.mxu0 %v601
        %633 = vmatpush.msra.mxu0 %v600
        %634 = vmatpush.msra.mxu0 %v599
        %635 = vmatpush.msra.mxu0 %v598
        %636 = vmatpush.msra.mxu0 %v597
        %637 = vmatpush.msra.mxu0 %v596
        %638 = vmatpush.msra.mxu0 %v595
        %639 = vmatpush.msra.mxu0 %v594
        %640 = vmatpush.msra.mxu0 %v593
        %641 = vmatpush.msra.mxu0 %v592
        %642 = vmatpush.msra.mxu0 %v591
        %643 = vmatpush.msra.mxu0 %v590
        %644 = vmatpush.msra.mxu0 %v589
        %645 = vmatmul.f32.gmra.mxu0 %v572
        %v646 = vpop.f32.mrf.mxu0
        %v647 = vadd.f32 %v627, %v646
        %648 = vdwg.mxu0
        %v649 = vlaneseq
        %v650 = vand.u32 %v649, 127
        %vm651 = vcmp.lt.s32.totalorder %v650, 4
        %v652 = vsel %vm651, %v647, -inf
        %653 = vmax.xlane.f32.xlu0 %v652
        %v654 = vpop.xlane.xlu0 %653
        %v655 = vsub.f32 %v652, %v654
        %v656 = vmul.f32 %v655, 1.442695
        %v657 = vpow.pop %v656
        %v658 = vsel %vm651, %v657, 0.0
        %659 = vadd.xlane.f32.xlu0 %v658
        %v660 = vpop.xlane.xlu0 %659
        %v661 = vrcp.pop %v660
        %v662 = vmul.f32 %v660, %v661
        %v663 = vsub.f32 1.0, %v662
        %v664 = vmul.f32 %v661, %v663
        %v665 = vadd.f32 %v661, %v664
        %vm666 = vweird.f32 %v660
        %vm667 = vweird.f32 %v661
        %vm668 = vmor %vm666, %vm667
        %v669 = vsel %vm668, %v661, %v665
        %v670 = vand.u32 2147483647, %v660
        %vm671 = vcmp.eq.f32.partialorder %v670, 8.507059e+37
        %v672 = vand.u32 %v660, 2147483648
        %v673 = vor.u32 1.1754944e-38, %v672
        %v674 = vsel %vm671, %v673, %v669
        %v675 = vmul.f32 %v658, %v674
        %vm676 = vcmp.eq.s32.totalorder %v650, 4
        %v677 = vsel %vm676, %v647, %v675
        %678 = vst [vmem:[%s359] sm:$0xff] %v677
        %s679 = sand.u32 %s186, 1
        %s680 = scalar_lea.sflag [#allocation4], %s679
        %s681 = sand.u32 %s186, 1
        %s682 = smul.addr %s681, 8
        %s683 = scalar_lea.vmem [#allocation11], %s682
        // Predicated region
        $region69: #{tpu_custom_call.1} parent=47 // pred_check
          %p684 = pneg %p196
        $region70: #{tpu_custom_call.1} parent=47 // pred_check_branch
          %686 = sbr.rel (%p684) target = $region72
        $region71: #{tpu_custom_call.1} parent=47 // pred_region
          %688 = vsyncadd %s680, 0
          %s689 = smul.addr %s26, 8
          %s690 = scalar_lea.hbm %s7, %s689
          %s692 = sshll.u32 %s683, 4
          %s693 = int_to_ptr.vmem [resolvable:$true] %s692
          %s694 = sshll.u32 %s690, 4
          %s695 = int_to_ptr.hbm [resolvable:$true] %s694
          %697 = dma.vmem_to_hbm [thread:$0]  %s693, 128, %s695, %s680
        $region72: #{tpu_custom_call.1} parent=47 // pred_fallthru
          _
      $region48: #{tpu_custom_call.1} parent=5 // pred_fallthru
        _
      %p698 = scmp.le.s32.totalorder 2, %s21
      // Predicated region
      $region73: #{tpu_custom_call.1} parent=5 // pred_check
        %p699 = pneg %p698
      $region74: #{tpu_custom_call.1} parent=5 // pred_check_branch
        %701 = sbr.rel (%p699) target = $region76
      $region75: #{tpu_custom_call.1} parent=5 // pred_region
        %s702 = ssub.s32 %s21, 2
        // Predicated region
        $region77: #{tpu_custom_call.1} parent=75 // pred_check
          %p703 = pneg %p202
        $region78: #{tpu_custom_call.1} parent=75 // pred_check_branch
          %705 = sbr.rel (%p703) target = $region80
        $region79: #{tpu_custom_call.1} parent=75 // pred_region
          %s706 = sand.u32 %s187, 1
          %s707 = scalar_lea.sflag [#allocation4], %s706
          %s708 = sand.u32 %s187, 1
          %s709 = smul.addr %s708, 8
          %s710 = scalar_lea.vmem [#allocation11], %s709
          %712 = dma.done %s707, 128
        $region80: #{tpu_custom_call.1} parent=75 // pred_fallthru
          _
      $region76: #{tpu_custom_call.1} parent=5 // pred_fallthru
        _
    $region6: #{tpu_custom_call.1} parent=1 // loop_footer
      %s25 = sadd.s32 1, %s21
    $region7: #{tpu_custom_call.1} parent=1 // loop_footer_branch
      %20 = sbr.rel target = $region3
    $region8: #{tpu_custom_call.1} parent=1 // loop_exit
      _
    %713 = vsyncpa [#allocation3], 1
    %s714 = scalar_lea.sflag [#allocation3], 1
    %715 = vsyncpa %s714, 1
    %716 = vsyncpa [#allocation6], 1
    %717 = vsyncpa [#allocation9], 1
    %718 = vsyncpa [#allocation4], 1
    %s719 = scalar_lea.sflag [#allocation4], 1
    %720 = vsyncpa %s719, 1

</llo_original>
